<compile_context>
chip_gen: v7x
topology: tpu7x:2x2x1
jax: 0.10.0
libtpu: 0.0.40
codegen_flags: <defaults>
</compile_context>

<pallas_src>
import functools

import jax
import jax.numpy as jnp
from jax.experimental import pallas as pl
from jax.experimental.pallas import tpu as pltpu

EPS = 1e-5  # PyTorch F.layer_norm default eps

_MIB = 1024 * 1024
_TARGET_BLOCK_BYTES = 4 * _MIB          # ~HBM-roofline sweet spot per pipelined block (f32 footprint)
_MAX_SINGLE_PASS_ROW_BLOCK = 6 * _MIB   # above this, switch to column-tiled two-pass
_COL_ALIGN = 128                        # lane-dense stores


def _row_align(dtype) -> int:
    """Sublane packing: 8 rows for 4-byte, 16 for 2-byte, 32 for 1-byte dtypes."""
    itemsize = jnp.dtype(dtype).itemsize
    return max(8, 8 * (4 // max(itemsize, 1)))


def _single_pass_kernel(x_ref, o_ref, *, inv_n):
    """Normalise each row of a (rows_pb, n_cols) tile (whole row resident)."""
    x = x_ref[...].astype(jnp.float32)
    s = jnp.sum(x, axis=-1, keepdims=True)
    sq = jnp.sum(x * x, axis=-1, keepdims=True)
    mean = s * inv_n
    var = jnp.maximum(sq * inv_n - mean * mean, 0.0)  # clamp cancellation error
    inv = jax.lax.rsqrt(var + EPS)
    o_ref[...] = ((x - mean) * inv).astype(o_ref.dtype)


def _two_pass_kernel(x_ref, o_ref, sum_ref, sq_ref, *, n_cols, col_tile):
    """Column-tiled two-pass row normalisation.

    grid = (row_blocks, 2, col_blocks); pass 0 accumulates sum / sumsq into
    VMEM scratch, pass 1 normalises and writes the output chunk.
    """
    p = pl.program_id(1)
    j = pl.program_id(2)

    @pl.when(jnp.logical_and(p == 0, j == 0))
    def _init():
        sum_ref[...] = jnp.zeros_like(sum_ref)
        sq_ref[...] = jnp.zeros_like(sq_ref)

    x = x_ref[...].astype(jnp.float32)
    # Mask columns past the true row length (ragged last column block).
    col = j * col_tile + jax.lax.broadcasted_iota(jnp.int32, x.shape, 1)
    xv = jnp.where(col < n_cols, x, 0.0)

    @pl.when(p == 0)
    def _accumulate():
        sum_ref[...] += jnp.sum(xv, axis=-1, keepdims=True)
        sq_ref[...] += jnp.sum(xv * xv, axis=-1, keepdims=True)

    @pl.when(p == 1)
    def _normalize():
        inv_n = 1.0 / n_cols
        mean = sum_ref[...] * inv_n
        var = jnp.maximum(sq_ref[...] * inv_n - mean * mean, 0.0)
        inv = jax.lax.rsqrt(var + EPS)
        o_ref[...] = ((x - mean) * inv).astype(o_ref.dtype)


def instance_norm(x, grid_H, *, force_two_pass=False):
    """Pallas equivalent of InstanceNorm.forward.

    x: [batch, channel, group, x, y]   (normalised over the last 3 dims)
    grid_H: passed through unchanged.
    """
    B, C, G, H, W = x.shape
    n_rows = B * C
    n_cols = G * H * W
    x2d = x.reshape(n_rows, n_cols)

    align = _row_align(x.dtype)
    bytes_per_row_f32 = n_cols * 4

    use_two_pass = force_two_pass or (align * bytes_per_row_f32 > _MAX_SINGLE_PASS_ROW_BLOCK)

    if not use_two_pass:
        # --- whole-row, row-tiled single pass -------------------------------
        if n_rows <= align:
            rows_pb = n_rows                     # block equals the full row dim
        else:
            rows_pb = max(1, _TARGET_BLOCK_BYTES // bytes_per_row_f32)
            rows_pb = max(align, (rows_pb // align) * align)
            rows_pb = min(rows_pb, (n_rows // align) * align)
        block_f32 = rows_pb * n_cols * 4
        vmem_limit = int(min(64 * _MIB, max(32 * _MIB, 8 * block_f32)))

        out2d = pl.pallas_call(
            functools.partial(_single_pass_kernel, inv_n=1.0 / n_cols),
            out_shape=jax.ShapeDtypeStruct((n_rows, n_cols), x.dtype),
            grid_spec=pltpu.PrefetchScalarGridSpec(
                num_scalar_prefetch=0,
                grid=(pl.cdiv(n_rows, rows_pb),),
                in_specs=[pl.BlockSpec((rows_pb, n_cols), lambda i: (i, 0))],
                out_specs=pl.BlockSpec((rows_pb, n_cols), lambda i: (i, 0)),
            ),
            compiler_params=pltpu.CompilerParams(
                dimension_semantics=("parallel",),
                vmem_limit_bytes=vmem_limit,
            ),
        )(x2d)
    else:
        # --- column-tiled two-pass (rows too wide to hold in VMEM) ----------
        rows_pb = n_rows if n_rows <= align else align
        if n_cols <= _COL_ALIGN:
            col_tile = n_cols
        else:
            col_tile = max(1, _TARGET_BLOCK_BYTES // (rows_pb * 4))
            col_tile = max(_COL_ALIGN, (col_tile // _COL_ALIGN) * _COL_ALIGN)
            col_tile = min(col_tile, (n_cols // _COL_ALIGN) * _COL_ALIGN)
        block_f32 = rows_pb * col_tile * 4
        vmem_limit = int(min(64 * _MIB, max(32 * _MIB, 8 * block_f32)))

        out2d = pl.pallas_call(
            functools.partial(_two_pass_kernel, n_cols=n_cols, col_tile=col_tile),
            out_shape=jax.ShapeDtypeStruct((n_rows, n_cols), x.dtype),
            grid_spec=pltpu.PrefetchScalarGridSpec(
                num_scalar_prefetch=0,
                grid=(pl.cdiv(n_rows, rows_pb), 2, pl.cdiv(n_cols, col_tile)),
                in_specs=[pl.BlockSpec((rows_pb, col_tile), lambda i, p, j: (i, j))],
                # During pass 0 park the output window at column-block 0 so each
                # output block is written back exactly once (after pass 1).
                out_specs=pl.BlockSpec((rows_pb, col_tile), lambda i, p, j: (i, j * p)),
                scratch_shapes=[
                    pltpu.VMEM((rows_pb, 1), jnp.float32),  # running sum
                    pltpu.VMEM((rows_pb, 1), jnp.float32),  # running sum of squares
                ],
            ),
            compiler_params=pltpu.CompilerParams(
                dimension_semantics=("parallel", "arbitrary", "arbitrary"),
                vmem_limit_bytes=vmem_limit,
            ),
        )(x2d)

    return out2d.reshape(B, C, G, H, W), grid_H


def _reference(x):
    # Pure-JAX reference of F.layer_norm(x, x.shape[-3:]) with no affine.
    mean = jnp.mean(x, axis=(-3, -2, -1), keepdims=True)
    var = jnp.mean((x - mean) ** 2, axis=(-3, -2, -1), keepdims=True)
    return (x - mean) / jnp.sqrt(var + EPS)


if __name__ == "__main__":
    key = jax.random.PRNGKey(0)
    k1, k2, k3 = jax.random.split(key, 3)

    # Primary shape: [batch, channel, group, x, y]
    B, C, G, H, W = 2, 4, 8, 16, 16
    x = jax.random.normal(k1, (B, C, G, H, W), dtype=jnp.float32)
    # grid_H is just passed through by the module; small dummy tensor.
    grid_H = jax.random.normal(k2, (G, 2, 2), dtype=jnp.float32)

    out, grid_H_out = instance_norm(x, grid_H)
    out = jax.block_until_ready(out)
    ref = _reference(x)
    assert out.shape == x.shape
    assert grid_H_out.shape == grid_H.shape
    assert jnp.allclose(out, ref, atol=1e-4, rtol=1e-4), "mismatch vs reference (single-pass)"
    assert jnp.allclose(grid_H_out, grid_H), "grid_H must pass through unchanged"

    # Also exercise the column-tiled two-pass path (used when G*H*W is too wide
    # for VMEM, e.g. on v7x) on a small shape with a ragged last column block.
    B2, C2, G2, H2, W2 = 2, 4, 5, 12, 12   # n_cols = 720 (not a multiple of 128)
    x2 = jax.random.normal(k3, (B2, C2, G2, H2, W2), dtype=jnp.float32)
    out2, _ = instance_norm(x2, grid_H, force_two_pass=True)
    out2 = jax.block_until_ready(out2)
    assert jnp.allclose(out2, _reference(x2), atol=1e-4, rtol=1e-4), "mismatch vs reference (two-pass)"

    print("KERNEL_OK")
</pallas_src>

<mosaic_0001>
module attributes {stable_mosaic.version = 11 : i64} {
  func.func @_single_pass_kernel(%arg0: i32, %arg1: memref<8x2048xf32, #tpu.memory_space<vmem>>, %arg2: memref<8x2048xf32, #tpu.memory_space<vmem>>) attributes {dimension_semantics = [#tpu.dimension_semantics<parallel>], iteration_bounds = array<i64: 1>, scalar_prefetch = 0 : i64, scratch_operands = 0 : i64, tpu.core_type = #tpu.core_type<tc>, window_params = [{transform_indices = @transform_0, window_bounds = array<i64: 8, 2048>}, {transform_indices = @transform_1, window_bounds = array<i64: 8, 2048>}]} {
    %c0 = arith.constant 0 : index
    %c0_0 = arith.constant 0 : index
    %0 = vector.load %arg1[%c0, %c0_0] : memref<8x2048xf32, #tpu.memory_space<vmem>>, vector<8x2048xf32>
    %cst = arith.constant dense<0.000000e+00> : vector<8xf32>
    %1 = vector.multi_reduction <add>, %0, %cst [1] : vector<8x2048xf32> to vector<8xf32>
    %2 = vector.shape_cast %1 : vector<8xf32> to vector<8x1xf32>
    %3 = arith.mulf %0, %0 : vector<8x2048xf32>
    %cst_1 = arith.constant dense<0.000000e+00> : vector<8xf32>
    %4 = vector.multi_reduction <add>, %3, %cst_1 [1] : vector<8x2048xf32> to vector<8xf32>
    %5 = vector.shape_cast %4 : vector<8xf32> to vector<8x1xf32>
    %cst_2 = arith.constant 4.8828125E-4 : f32
    %6 = vector.broadcast %cst_2 : f32 to vector<8x1xf32>
    %7 = arith.mulf %2, %6 : vector<8x1xf32>
    %cst_3 = arith.constant 4.8828125E-4 : f32
    %8 = vector.broadcast %cst_3 : f32 to vector<8x1xf32>
    %9 = arith.mulf %5, %8 : vector<8x1xf32>
    %10 = arith.mulf %7, %7 : vector<8x1xf32>
    %11 = arith.subf %9, %10 : vector<8x1xf32>
    %cst_4 = arith.constant 0.000000e+00 : f32
    %12 = vector.broadcast %cst_4 : f32 to vector<8x1xf32>
    %13 = arith.maximumf %11, %12 : vector<8x1xf32>
    %cst_5 = arith.constant 9.99999974E-6 : f32
    %14 = vector.broadcast %cst_5 : f32 to vector<8x1xf32>
    %15 = arith.addf %13, %14 : vector<8x1xf32>
    %16 = math.rsqrt %15 : vector<8x1xf32>
    %17 = vector.broadcast %7 : vector<8x1xf32> to vector<8x2048xf32>
    %18 = arith.subf %0, %17 : vector<8x2048xf32>
    %19 = vector.broadcast %16 : vector<8x1xf32> to vector<8x2048xf32>
    %20 = arith.mulf %18, %19 : vector<8x2048xf32>
    %c0_6 = arith.constant 0 : index
    %c0_7 = arith.constant 0 : index
    %21 = vector.load %arg2[%c0_6, %c0_7] : memref<8x2048xf32, #tpu.memory_space<vmem>>, vector<8x2048xf32>
    tpu.vector_store %arg2[%c0_6, %c0_7], %20 {strides = array<i32>} : memref<8x2048xf32, #tpu.memory_space<vmem>>, vector<8x2048xf32>,
    return
  }
  func.func @transform_0(%arg0: i32) -> (i32, i32) {
    %c0_i32 = arith.constant 0 : i32
    %c0_i32_0 = arith.constant 0 : i32
    return %arg0, %c0_i32 : i32, i32
  }
  func.func @transform_1(%arg0: i32) -> (i32, i32) {
    %c0_i32 = arith.constant 0 : i32
    %c0_i32_0 = arith.constant 0 : i32
    return %arg0, %c0_i32 : i32, i32
  }
}

</mosaic_0001>

<llo_original>
// kernel: tpu_custom_call.1
$region0: #{tpu_custom_call.1}
  #allocation0 [shape = 'u32[]', space=smem, size = 0x4, offset = 0x4, fixed_abs, tag = 'smem constant byte address 0x4 - core index']
  #allocation1 [shape = 'u32[144,128]{1,0:T(1,128)}', space=vmem, size = 0x12000, scoped, tag = 'internal scratch']
  %s0 = inlined_call_operand.hbm [shape: f32[8,2048], index: 0, kind: input, shape index: {}]
  %s1 = inlined_call_operand.hbm [shape: f32[8,2048], index: 1, kind: output, shape index: {}]
  %s2 = sld [smem:[#allocation0]]
  $region18: #{tpu_custom_call.1} parent=0
    _
  %s4 = ssub.s32 1, %s2
  %s5 = scalar_select 0, %s4, %s2
  $region1: #{tpu_custom_call.1} parent=0
    #allocation2 [shape = 'u8[65536]{0}', space=vmem, size = 0x10000, scoped, tag = 'input window, operand 0, single buffered']
    #allocation3 [shape = 's32[1]{0}', space=sflag, size = 0x4, scoped, tag = 'scoped memory for tpu_custom_call.1']
    #allocation4 [shape = 's32[1]{0}', space=sflag, size = 0x4, scoped, tag = 'scoped memory for tpu_custom_call.1']
    #allocation5 [shape = 'u8[65536]{0}', space=vmem, size = 0x10000, scoped, tag = 'output window, operand 0, single buffered']
    %6 = vsyncpa [#allocation3], 0
    %7 = vsyncpa [#allocation4], 0
    // Predicated region
    $region2: #{tpu_custom_call.1} parent=1 // pred_check
      _
    $region3: #{tpu_custom_call.1} parent=1 // pred_check_branch
      %9 = sbr.rel (0) target = $region5
    $region4: #{tpu_custom_call.1} parent=1 // pred_region
      %s11 = ssub.s32 2048, 2048
      %12 = vsyncadd [#allocation3], %s11
      %s14 = sshll.u32 [#allocation2], 4
      %s15 = int_to_ptr.vmem [resolvable:$true] %s14
      %17 = dma.hbm_to_vmem [thread:$0]  %s0, 2048, %s15, [#allocation3]
    $region5: #{tpu_custom_call.1} parent=1 // pred_fallthru
      _
    // Predicated region
    $region6: #{tpu_custom_call.1} parent=1 // pred_check
      _
    $region7: #{tpu_custom_call.1} parent=1 // pred_check_branch
      %19 = sbr.rel (0) target = $region9
    $region8: #{tpu_custom_call.1} parent=1 // pred_region
      %20 = dma.done [#allocation3], 2048
    $region9: #{tpu_custom_call.1} parent=1 // pred_fallthru
      _
    %v21 = vld [vmem:[#allocation2] sm:$0xff]
    %v22 = vld [vmem:[#allocation2 + $0x8] sm:$0xff]
    %v23 = vld [vmem:[#allocation2 + $0x10] sm:$0xff]
    %v24 = vld [vmem:[#allocation2 + $0x18] sm:$0xff]
    %v25 = vld [vmem:[#allocation2 + $0x20] sm:$0xff]
    %v26 = vld [vmem:[#allocation2 + $0x28] sm:$0xff]
    %v27 = vld [vmem:[#allocation2 + $0x30] sm:$0xff]
    %v28 = vld [vmem:[#allocation2 + $0x38] sm:$0xff]
    %v29 = vld [vmem:[#allocation2 + $0x40] sm:$0xff]
    %v30 = vld [vmem:[#allocation2 + $0x48] sm:$0xff]
    %v31 = vld [vmem:[#allocation2 + $0x50] sm:$0xff]
    %v32 = vld [vmem:[#allocation2 + $0x58] sm:$0xff]
    %v33 = vld [vmem:[#allocation2 + $0x60] sm:$0xff]
    %v34 = vld [vmem:[#allocation2 + $0x68] sm:$0xff]
    %v35 = vld [vmem:[#allocation2 + $0x70] sm:$0xff]
    %v36 = vld [vmem:[#allocation2 + $0x78] sm:$0xff]
    %v37 = vadd.f32 %v21, %v22
    %v38 = vadd.f32 %v37, %v23
    %v39 = vadd.f32 %v38, %v24
    %v40 = vadd.f32 %v39, %v25
    %v41 = vadd.f32 %v40, %v26
    %v42 = vadd.f32 %v41, %v27
    %v43 = vadd.f32 %v42, %v28
    %v44 = vadd.f32 %v43, %v29
    %v45 = vadd.f32 %v44, %v30
    %v46 = vadd.f32 %v45, %v31
    %v47 = vadd.f32 %v46, %v32
    %v48 = vadd.f32 %v47, %v33
    %v49 = vadd.f32 %v48, %v34
    %v50 = vadd.f32 %v49, %v35
    %v51 = vadd.f32 %v50, %v36
    %52 = vadd.xlane.f32.xlu0 %v51
    %v53 = vpop.xlane.xlu0 %52
    %v54 = vmul.f32 %v21, %v21
    %v55 = vmul.f32 %v22, %v22
    %v56 = vmul.f32 %v23, %v23
    %v57 = vmul.f32 %v24, %v24
    %v58 = vmul.f32 %v25, %v25
    %v59 = vmul.f32 %v26, %v26
    %v60 = vmul.f32 %v27, %v27
    %v61 = vmul.f32 %v28, %v28
    %v62 = vmul.f32 %v29, %v29
    %v63 = vmul.f32 %v30, %v30
    %v64 = vmul.f32 %v31, %v31
    %v65 = vmul.f32 %v32, %v32
    %v66 = vmul.f32 %v33, %v33
    %v67 = vmul.f32 %v34, %v34
    %v68 = vmul.f32 %v35, %v35
    %v69 = vmul.f32 %v36, %v36
    %v70 = vadd.f32 %v54, %v55
    %v71 = vadd.f32 %v70, %v56
    %v72 = vadd.f32 %v71, %v57
    %v73 = vadd.f32 %v72, %v58
    %v74 = vadd.f32 %v73, %v59
    %v75 = vadd.f32 %v74, %v60
    %v76 = vadd.f32 %v75, %v61
    %v77 = vadd.f32 %v76, %v62
    %v78 = vadd.f32 %v77, %v63
    %v79 = vadd.f32 %v78, %v64
    %v80 = vadd.f32 %v79, %v65
    %v81 = vadd.f32 %v80, %v66
    %v82 = vadd.f32 %v81, %v67
    %v83 = vadd.f32 %v82, %v68
    %v84 = vadd.f32 %v83, %v69
    %85 = vadd.xlane.f32.xlu0 %v84
    %v86 = vpop.xlane.xlu0 %85
    %v87 = vmul.f32 %v53, 0.00048828125
    %v88 = vmul.f32 %v86, 0.00048828125
    %v89 = vmul.f32 %v87, %v87
    %v90 = vsub.f32 %v88, %v89
    %v91 = vmax.f32 %v90, 0.0
    %v92 = vadd.f32 %v91, 1e-05
    %v93 = vrsqrt.pop %v92
    %v94 = vsub.f32 %v21, %v87
    %v95 = vsub.f32 %v22, %v87
    %v96 = vsub.f32 %v23, %v87
    %v97 = vsub.f32 %v24, %v87
    %v98 = vsub.f32 %v25, %v87
    %v99 = vsub.f32 %v26, %v87
    %v100 = vsub.f32 %v27, %v87
    %v101 = vsub.f32 %v28, %v87
    %v102 = vsub.f32 %v29, %v87
    %v103 = vsub.f32 %v30, %v87
    %v104 = vsub.f32 %v31, %v87
    %v105 = vsub.f32 %v32, %v87
    %v106 = vsub.f32 %v33, %v87
    %v107 = vsub.f32 %v34, %v87
    %v108 = vsub.f32 %v35, %v87
    %v109 = vsub.f32 %v36, %v87
    %v110 = vmul.f32 %v94, %v93
    %v111 = vmul.f32 %v95, %v93
    %v112 = vmul.f32 %v96, %v93
    %v113 = vmul.f32 %v97, %v93
    %v114 = vmul.f32 %v98, %v93
    %v115 = vmul.f32 %v99, %v93
    %v116 = vmul.f32 %v100, %v93
    %v117 = vmul.f32 %v101, %v93
    %v118 = vmul.f32 %v102, %v93
    %v119 = vmul.f32 %v103, %v93
    %v120 = vmul.f32 %v104, %v93
    %v121 = vmul.f32 %v105, %v93
    %v122 = vmul.f32 %v106, %v93
    %v123 = vmul.f32 %v107, %v93
    %v124 = vmul.f32 %v108, %v93
    %v125 = vmul.f32 %v109, %v93
    %126 = vst [vmem:[#allocation5] sm:$0xff] %v110
    %127 = vst [vmem:[#allocation5 + $0x8] sm:$0xff] %v111
    %128 = vst [vmem:[#allocation5 + $0x10] sm:$0xff] %v112
    %129 = vst [vmem:[#allocation5 + $0x18] sm:$0xff] %v113
    %130 = vst [vmem:[#allocation5 + $0x20] sm:$0xff] %v114
    %131 = vst [vmem:[#allocation5 + $0x28] sm:$0xff] %v115
    %132 = vst [vmem:[#allocation5 + $0x30] sm:$0xff] %v116
    %133 = vst [vmem:[#allocation5 + $0x38] sm:$0xff] %v117
    %134 = vst [vmem:[#allocation5 + $0x40] sm:$0xff] %v118
    %135 = vst [vmem:[#allocation5 + $0x48] sm:$0xff] %v119
    %136 = vst [vmem:[#allocation5 + $0x50] sm:$0xff] %v120
    %137 = vst [vmem:[#allocation5 + $0x58] sm:$0xff] %v121
    %138 = vst [vmem:[#allocation5 + $0x60] sm:$0xff] %v122
    %139 = vst [vmem:[#allocation5 + $0x68] sm:$0xff] %v123
    %140 = vst [vmem:[#allocation5 + $0x70] sm:$0xff] %v124
    %141 = vst [vmem:[#allocation5 + $0x78] sm:$0xff] %v125
    // Predicated region
    $region10: #{tpu_custom_call.1} parent=1 // pred_check
      _
    $region11: #{tpu_custom_call.1} parent=1 // pred_check_branch
      %143 = sbr.rel (0) target = $region13
    $region12: #{tpu_custom_call.1} parent=1 // pred_region
      %s145 = ssub.s32 2048, 2048
      %146 = vsyncadd [#allocation4], %s145
      %s148 = sshll.u32 [#allocation5], 4
      %s149 = int_to_ptr.vmem [resolvable:$true] %s148
      %151 = dma.vmem_to_hbm [thread:$0]  %s149, 2048, %s1, [#allocation4]
    $region13: #{tpu_custom_call.1} parent=1 // pred_fallthru
      _
    // Predicated region
    $region14: #{tpu_custom_call.1} parent=1 // pred_check
      _
    $region15: #{tpu_custom_call.1} parent=1 // pred_check_branch
      %153 = sbr.rel (0) target = $region17
    $region16: #{tpu_custom_call.1} parent=1 // pred_region
      %154 = dma.done [#allocation4], 2048
    $region17: #{tpu_custom_call.1} parent=1 // pred_fallthru
      _
    %155 = vsyncpa [#allocation3], 1
    %156 = vsyncpa [#allocation4], 1

</llo_original>
